<compile_context>
chip_gen: v7x
topology: tpu7x:2x2x1
jax: 0.10.0
libtpu: 0.0.40
codegen_flags: <defaults>
</compile_context>

<pallas_src>
import functools

import jax
import jax.numpy as jnp
from jax.experimental import pallas as pl
from jax.experimental.pallas import tpu as pltpu

_LANE = 128
_SUBLANE = 8
_MAX_BATCH_TILE = 1024   # rows per grid step; sized for v7x 64 MiB VMEM


def _round_up(n, m):
    return ((n + m - 1) // m) * m


def _make_generator_kernel(n_hidden):
    """Generator dense path: tanh-MLP + fused (edges|nodes) output head.

    Ref order: x, (w_i, b_i) * n_hidden, w_heads, b_heads, out.
    Weights bf16, biases f32, activations carried bf16, MXU accumulates f32.
    """

    def kernel(*refs):
        x_ref = refs[0]
        h = x_ref[...].astype(jnp.bfloat16)          # bf16 activations between layers
        idx = 1
        for _ in range(n_hidden):
            w = refs[idx][...]                        # bf16 (K, Npad), Npad % 128 == 0
            b = refs[idx + 1][...]                    # f32  (1, Npad)
            pre = jnp.dot(h, w, preferred_element_type=jnp.float32) + b
            h = jnp.tanh(pre).astype(jnp.bfloat16)    # tanh in f32 (v5e: no bf16 EUP)
            idx += 2
        w_h = refs[idx][...]                          # bf16 (C, E_pad + N_pad)
        b_h = refs[idx + 1][...]                      # f32  (1, E_pad + N_pad)
        out_ref = refs[idx + 2]                       # f32  (TB, E_pad + N_pad), lane-dense
        out_ref[...] = jnp.dot(h, w_h, preferred_element_type=jnp.float32) + b_h

    return kernel


def pack_generator_params(params, z_dim, *, vertexes, edges, nodes):
    """One-time packing of parameters into lane-dense bf16 kernel operands.

    Call ONCE (outside the jitted forward) and reuse the result every step:
      - hidden output dims are zero-padded to multiples of 128 lanes
      - the edges head has (e + e^T)/2 and permute(0, 2, 3, 1) folded into its
        columns (both linear in the weights/bias)
      - edges + zero-padded nodes heads are concatenated into one fused head
        so the kernel emits a single lane-dense (B, E_pad + N_pad) slab
    """
    V, E, N = vertexes, edges, nodes
    hidden = params["hidden"]
    w_e, b_e = params["edges_layer"]
    w_n, b_n = params["nodes_layer"]

    packed_hidden = []
    in_dim = z_dim                                    # first-layer K left unpadded
    for w, b in hidden:
        k, n = w.shape
        n_pad = _round_up(n, _LANE)
        w_p = jnp.zeros((in_dim, n_pad), jnp.float32).at[:k, :n].set(w)
        b_p = jnp.zeros((1, n_pad), jnp.float32).at[0, :n].set(b)
        packed_hidden.append((w_p.astype(jnp.bfloat16), b_p))
        in_dim = n_pad

    c_last = w_e.shape[0]
    # Edges head: bake symmetrization and channel-last permute into columns.
    w_e4 = w_e.reshape(c_last, E, V, V)
    w_e4 = 0.5 * (w_e4 + jnp.swapaxes(w_e4, -1, -2))
    w_e_perm = jnp.transpose(w_e4, (0, 2, 3, 1)).reshape(c_last, V * V * E)
    b_e3 = b_e.reshape(E, V, V)
    b_e3 = 0.5 * (b_e3 + jnp.swapaxes(b_e3, -1, -2))
    b_e_perm = jnp.transpose(b_e3, (1, 2, 0)).reshape(V * V * E)

    e_cols = _round_up(V * V * E, _LANE)              # 256 here
    n_cols = _round_up(V * N, _LANE)                  # 128 here (pads 40 -> 128)
    w_heads = jnp.zeros((in_dim, e_cols + n_cols), jnp.float32)
    w_heads = w_heads.at[:c_last, :V * V * E].set(w_e_perm)
    w_heads = w_heads.at[:c_last, e_cols:e_cols + V * N].set(w_n)
    b_heads = jnp.zeros((1, e_cols + n_cols), jnp.float32)
    b_heads = b_heads.at[0, :V * V * E].set(b_e_perm)
    b_heads = b_heads.at[0, e_cols:e_cols + V * N].set(b_n)

    return {
        "hidden": packed_hidden,
        "w_heads": w_heads.astype(jnp.bfloat16),
        "b_heads": b_heads,
    }


def generator_forward(x, packed, *, vertexes, edges, nodes):
    """Pallas-backed equivalent of Generator.forward (inference mode).

    `packed` is the output of pack_generator_params (computed once, reused).
    """
    V, E, N = vertexes, edges, nodes
    batch, z_dim = x.shape
    hidden = packed["hidden"]
    w_heads = packed["w_heads"]
    b_heads = packed["b_heads"]
    n_hidden = len(hidden)

    e_cols = _round_up(V * V * E, _LANE)
    n_cols = _round_up(V * N, _LANE)
    out_cols = e_cols + n_cols
    assert w_heads.shape[1] == out_cols and b_heads.shape[1] == out_cols

    # Pad batch to full f32 sublanes and a multiple of the batch tile:
    # unmasked stores, full MXU rows.  Padded rows are dropped afterwards.
    b_pad = _round_up(max(batch, _SUBLANE), _SUBLANE)
    tb = min(b_pad, _MAX_BATCH_TILE)
    b_pad = _round_up(b_pad, tb)
    if b_pad != batch:
        x = jnp.pad(x, ((0, b_pad - batch), (0, 0)))
    num_tiles = b_pad // tb

    flat_inputs = [x]
    for w, b in hidden:
        flat_inputs += [w, b]
    flat_inputs += [w_heads, b_heads]

    # x / out stream over the batch grid; weights use full-array blocks with
    # constant index_maps (loaded once, never re-fetched across grid steps).
    const_map = lambda i: (0, 0)
    in_specs = [pl.BlockSpec((tb, z_dim), lambda i: (i, 0))]
    for w, b in hidden:
        in_specs.append(pl.BlockSpec(w.shape, const_map))
        in_specs.append(pl.BlockSpec(b.shape, const_map))
    in_specs.append(pl.BlockSpec(w_heads.shape, const_map))
    in_specs.append(pl.BlockSpec(b_heads.shape, const_map))
    out_specs = pl.BlockSpec((tb, out_cols), lambda i: (i, 0))

    # Advisory cost estimate so XLA schedules this tiny custom call sensibly.
    flops = 2 * b_pad * w_heads.shape[0] * w_heads.shape[1]
    transcendentals = 0
    for w, _ in hidden:
        flops += 2 * b_pad * w.shape[0] * w.shape[1]
        transcendentals += b_pad * w.shape[1]
    bytes_accessed = sum(int(a.size) * a.dtype.itemsize for a in flat_inputs)
    bytes_accessed += b_pad * out_cols * 4

    fused = pl.pallas_call(
        _make_generator_kernel(n_hidden),
        out_shape=jax.ShapeDtypeStruct((b_pad, out_cols), jnp.float32),
        grid=(num_tiles,),
        in_specs=in_specs,
        out_specs=out_specs,
        compiler_params=pltpu.CompilerParams(
            dimension_semantics=("parallel",)),
        cost_estimate=pl.CostEstimate(
            flops=int(flops),
            transcendentals=int(transcendentals),
            bytes_accessed=int(bytes_accessed)),
    )(*flat_inputs)

    # Only slices + reshapes remain outside the kernel (pure layout views).
    fused = fused[:batch]
    edges_logits = fused[:, :V * V * E].reshape(batch, V, V, E)
    nodes_logits = fused[:, e_cols:e_cols + V * N].reshape(batch, V, N)
    return edges_logits, nodes_logits


def _reference_forward_f32(x, params, *, vertexes, edges, nodes):
    """Pure-JAX f32 reference matching the PyTorch forward (eval mode)."""
    h = x
    for w, b in params["hidden"]:
        h = jnp.tanh(h @ w + b)
    e = h @ params["edges_layer"][0] + params["edges_layer"][1]
    n = h @ params["nodes_layer"][0] + params["nodes_layer"][1]
    batch = x.shape[0]
    e = e.reshape(batch, edges, vertexes, vertexes)
    e = (e + jnp.swapaxes(e, -1, -2)) / 2.0
    e = jnp.transpose(e, (0, 2, 3, 1))
    n = n.reshape(batch, vertexes, nodes)
    return e, n


def _reference_forward_packed(x, packed, *, vertexes, edges, nodes):
    """Pure-JAX mirror of the exact kernel math (bf16 weights/acts, f32 acc)."""
    V, E, N = vertexes, edges, nodes
    batch = x.shape[0]
    e_cols = _round_up(V * V * E, _LANE)
    h = x.astype(jnp.bfloat16)
    for w, b in packed["hidden"]:
        h = jnp.tanh(jnp.dot(h, w, preferred_element_type=jnp.float32) + b)
        h = h.astype(jnp.bfloat16)
    fused = jnp.dot(h, packed["w_heads"],
                    preferred_element_type=jnp.float32) + packed["b_heads"]
    e = fused[:, :V * V * E].reshape(batch, V, V, E)
    n = fused[:, e_cols:e_cols + V * N].reshape(batch, V, N)
    return e, n


def _init_params(key, z_dim, conv_dims, vertexes, edges, nodes):
    """Deterministic synthetic parameter init (weights stored as (in, out))."""
    dims = [z_dim] + list(conv_dims)
    keys = jax.random.split(key, 2 * (len(conv_dims) + 2))
    ki = 0
    hidden = []
    for c_in, c_out in zip(dims[:-1], dims[1:]):
        w = 0.1 * jax.random.normal(keys[ki], (c_in, c_out), jnp.float32)
        b = 0.1 * jax.random.normal(keys[ki + 1], (c_out,), jnp.float32)
        hidden.append((w, b))
        ki += 2
    c_last = conv_dims[-1]
    e_out = edges * vertexes * vertexes
    n_out = vertexes * nodes
    w_e = 0.1 * jax.random.normal(keys[ki], (c_last, e_out), jnp.float32)
    b_e = 0.1 * jax.random.normal(keys[ki + 1], (e_out,), jnp.float32)
    w_n = 0.1 * jax.random.normal(keys[ki + 2], (c_last, n_out), jnp.float32)
    b_n = 0.1 * jax.random.normal(keys[ki + 3], (n_out,), jnp.float32)
    return {"hidden": hidden, "edges_layer": (w_e, b_e), "nodes_layer": (w_n, b_n)}


if __name__ == "__main__":
    # Small shapes consistent with the module.
    batch = 2
    z_dim = 32
    conv_dims = [64, 128]
    vertexes, edges, nodes = 8, 4, 5
    # dropout_rate = 0.0 (inference mode -> identity)

    key = jax.random.PRNGKey(0)
    k_params, k_x = jax.random.split(key)
    params = _init_params(k_params, z_dim, conv_dims, vertexes, edges, nodes)
    x = jax.random.normal(k_x, (batch, z_dim), jnp.float32)

    # One-time packing, OUTSIDE the jitted per-step path.
    packed = jax.tree_util.tree_map(
        lambda a: a,
        pack_generator_params(params, z_dim,
                              vertexes=vertexes, edges=edges, nodes=nodes))
    packed = jax.block_until_ready(packed)

    fwd = jax.jit(functools.partial(
        generator_forward, vertexes=vertexes, edges=edges, nodes=nodes))
    edges_logits, nodes_logits = fwd(x, packed)
    jax.block_until_ready((edges_logits, nodes_logits))

    assert edges_logits.shape == (batch, vertexes, vertexes, edges)
    assert nodes_logits.shape == (batch, vertexes, nodes)

    # Exact-math mirror (same bf16 weights/acts, f32 accumulate) -> tight tol.
    ref_e_q, ref_n_q = _reference_forward_packed(
        x, packed, vertexes=vertexes, edges=edges, nodes=nodes)
    assert jnp.allclose(edges_logits, ref_e_q, atol=1e-3, rtol=1e-3)
    assert jnp.allclose(nodes_logits, ref_n_q, atol=1e-3, rtol=1e-3)

    # Original f32 torch semantics -> loose tolerance (bf16 rounding).
    ref_e, ref_n = _reference_forward_f32(
        x, params, vertexes=vertexes, edges=edges, nodes=nodes)
    assert jnp.allclose(edges_logits, ref_e, atol=5e-2, rtol=5e-2)
    assert jnp.allclose(nodes_logits, ref_n, atol=5e-2, rtol=5e-2)

    print("KERNEL_OK")
</pallas_src>

<mosaic_0001>
module attributes {stable_mosaic.version = 11 : i64} {
  func.func @kernel(%arg0: i32, %arg1: memref<8x32xf32, #tpu.memory_space<vmem>>, %arg2: memref<32x128xbf16, #tpu.memory_space<vmem>>, %arg3: memref<1x128xf32, #tpu.memory_space<vmem>>, %arg4: memref<128x128xbf16, #tpu.memory_space<vmem>>, %arg5: memref<1x128xf32, #tpu.memory_space<vmem>>, %arg6: memref<128x384xbf16, #tpu.memory_space<vmem>>, %arg7: memref<1x384xf32, #tpu.memory_space<vmem>>, %arg8: memref<8x384xf32, #tpu.memory_space<vmem>>) attributes {dimension_semantics = [#tpu.dimension_semantics<parallel>], iteration_bounds = array<i64: 1>, scalar_prefetch = 0 : i64, scratch_operands = 0 : i64, tpu.core_type = #tpu.core_type<tc>, window_params = [{transform_indices = @transform_0, window_bounds = array<i64: 8, 32>}, {pipeline_mode = #tpu.pipeline_mode<synchronous>, transform_indices = @transform_1, window_bounds = array<i64: 32, 128>}, {pipeline_mode = #tpu.pipeline_mode<synchronous>, transform_indices = @transform_2, window_bounds = array<i64: 1, 128>}, {pipeline_mode = #tpu.pipeline_mode<synchronous>, transform_indices = @transform_3, window_bounds = array<i64: 128, 128>}, {pipeline_mode = #tpu.pipeline_mode<synchronous>, transform_indices = @transform_4, window_bounds = array<i64: 1, 128>}, {pipeline_mode = #tpu.pipeline_mode<synchronous>, transform_indices = @transform_5, window_bounds = array<i64: 128, 384>}, {pipeline_mode = #tpu.pipeline_mode<synchronous>, transform_indices = @transform_6, window_bounds = array<i64: 1, 384>}, {transform_indices = @transform_7, window_bounds = array<i64: 8, 384>}]} {
    %c0 = arith.constant 0 : index
    %c0_0 = arith.constant 0 : index
    %0 = vector.load %arg1[%c0, %c0_0] : memref<8x32xf32, #tpu.memory_space<vmem>>, vector<8x32xf32>
    %1 = arith.truncf %0 : vector<8x32xf32> to vector<8x32xbf16>
    %c0_1 = arith.constant 0 : index
    %c0_2 = arith.constant 0 : index
    %2 = vector.load %arg2[%c0_1, %c0_2] : memref<32x128xbf16, #tpu.memory_space<vmem>>, vector<32x128xbf16>
    %c0_3 = arith.constant 0 : index
    %c0_4 = arith.constant 0 : index
    %3 = vector.load %arg3[%c0_3, %c0_4] : memref<1x128xf32, #tpu.memory_space<vmem>>, vector<1x128xf32>
    %cst = arith.constant dense<0.000000e+00> : vector<8x128xf32>
    %4 = tpu.matmul %1, %2, %cst {dimension_numbers = #tpu.dot_dimension_numbers<[1], [0], [0], [1], [0, 0, 1, 1], [], []>} : vector<8x32xbf16>, vector<32x128xbf16>, vector<8x128xf32> -> vector<8x128xf32>
    %5 = vector.broadcast %3 : vector<1x128xf32> to vector<8x128xf32>
    %6 = arith.addf %4, %5 : vector<8x128xf32>
    %7 = math.tanh %6 : vector<8x128xf32>
    %8 = arith.truncf %7 : vector<8x128xf32> to vector<8x128xbf16>
    %c0_5 = arith.constant 0 : index
    %c0_6 = arith.constant 0 : index
    %9 = vector.load %arg4[%c0_5, %c0_6] : memref<128x128xbf16, #tpu.memory_space<vmem>>, vector<128x128xbf16>
    %c0_7 = arith.constant 0 : index
    %c0_8 = arith.constant 0 : index
    %10 = vector.load %arg5[%c0_7, %c0_8] : memref<1x128xf32, #tpu.memory_space<vmem>>, vector<1x128xf32>
    %cst_9 = arith.constant dense<0.000000e+00> : vector<8x128xf32>
    %11 = tpu.matmul %8, %9, %cst_9 {dimension_numbers = #tpu.dot_dimension_numbers<[1], [0], [0], [1], [0, 0, 1, 1], [], []>} : vector<8x128xbf16>, vector<128x128xbf16>, vector<8x128xf32> -> vector<8x128xf32>
    %12 = vector.broadcast %10 : vector<1x128xf32> to vector<8x128xf32>
    %13 = arith.addf %11, %12 : vector<8x128xf32>
    %14 = math.tanh %13 : vector<8x128xf32>
    %15 = arith.truncf %14 : vector<8x128xf32> to vector<8x128xbf16>
    %c0_10 = arith.constant 0 : index
    %c0_11 = arith.constant 0 : index
    %16 = vector.load %arg6[%c0_10, %c0_11] : memref<128x384xbf16, #tpu.memory_space<vmem>>, vector<128x384xbf16>
    %c0_12 = arith.constant 0 : index
    %c0_13 = arith.constant 0 : index
    %17 = vector.load %arg7[%c0_12, %c0_13] : memref<1x384xf32, #tpu.memory_space<vmem>>, vector<1x384xf32>
    %cst_14 = arith.constant dense<0.000000e+00> : vector<8x384xf32>
    %18 = tpu.matmul %15, %16, %cst_14 {dimension_numbers = #tpu.dot_dimension_numbers<[1], [0], [0], [1], [0, 0, 1, 1], [], []>} : vector<8x128xbf16>, vector<128x384xbf16>, vector<8x384xf32> -> vector<8x384xf32>
    %19 = vector.broadcast %17 : vector<1x384xf32> to vector<8x384xf32>
    %20 = arith.addf %18, %19 : vector<8x384xf32>
    %c0_15 = arith.constant 0 : index
    %c0_16 = arith.constant 0 : index
    %21 = vector.load %arg8[%c0_15, %c0_16] : memref<8x384xf32, #tpu.memory_space<vmem>>, vector<8x384xf32>
    tpu.vector_store %arg8[%c0_15, %c0_16], %20 {strides = array<i32>} : memref<8x384xf32, #tpu.memory_space<vmem>>, vector<8x384xf32>,
    return
  }
  func.func @transform_0(%arg0: i32) -> (i32, i32) {
    %c0_i32 = arith.constant 0 : i32
    %c0_i32_0 = arith.constant 0 : i32
    return %arg0, %c0_i32 : i32, i32
  }
  func.func @transform_1(%arg0: i32) -> (i32, i32) {
    %c0_i32 = arith.constant 0 : i32
    %c0_i32_0 = arith.constant 0 : i32
    %c0_i32_1 = arith.constant 0 : i32
    return %c0_i32, %c0_i32_0 : i32, i32
  }
  func.func @transform_2(%arg0: i32) -> (i32, i32) {
    %c0_i32 = arith.constant 0 : i32
    %c0_i32_0 = arith.constant 0 : i32
    %c0_i32_1 = arith.constant 0 : i32
    return %c0_i32, %c0_i32_0 : i32, i32
  }
  func.func @transform_3(%arg0: i32) -> (i32, i32) {
    %c0_i32 = arith.constant 0 : i32
    %c0_i32_0 = arith.constant 0 : i32
    %c0_i32_1 = arith.constant 0 : i32
    return %c0_i32, %c0_i32_0 : i32, i32
  }
  func.func @transform_4(%arg0: i32) -> (i32, i32) {
    %c0_i32 = arith.constant 0 : i32
    %c0_i32_0 = arith.constant 0 : i32
    %c0_i32_1 = arith.constant 0 : i32
    return %c0_i32, %c0_i32_0 : i32, i32
  }
  func.func @transform_5(%arg0: i32) -> (i32, i32) {
    %c0_i32 = arith.constant 0 : i32
    %c0_i32_0 = arith.constant 0 : i32
    %c0_i32_1 = arith.constant 0 : i32
    return %c0_i32, %c0_i32_0 : i32, i32
  }
  func.func @transform_6(%arg0: i32) -> (i32, i32) {
    %c0_i32 = arith.constant 0 : i32
    %c0_i32_0 = arith.constant 0 : i32
    %c0_i32_1 = arith.constant 0 : i32
    return %c0_i32, %c0_i32_0 : i32, i32
  }
  func.func @transform_7(%arg0: i32) -> (i32, i32) {
    %c0_i32 = arith.constant 0 : i32
    %c0_i32_0 = arith.constant 0 : i32
    return %arg0, %c0_i32 : i32, i32
  }
}

</mosaic_0001>

<llo_original>
// kernel: generator_forward.1
$region0: #{generator_forward.1}
  #allocation0 [shape = 'u32[]', space=smem, size = 0x4, offset = 0x4, fixed_abs, tag = 'smem constant byte address 0x4 - core index']
  #allocation1 [shape = 'u32[144,128]{1,0:T(1,128)}', space=vmem, size = 0x12000, scoped, tag = 'internal scratch']
  %s0 = inlined_call_operand.vmem [shape: f32[8,32], index: 0, kind: input, shape index: {}]
  %s1 = inlined_call_operand.vmem [shape: bf16[32,128], index: 1, kind: input, shape index: {}]
  %s2 = inlined_call_operand.vmem [shape: f32[1,128], index: 2, kind: input, shape index: {}]
  %s3 = inlined_call_operand.hbm [shape: bf16[128,128], index: 3, kind: input, shape index: {}]
  %s4 = inlined_call_operand.vmem [shape: f32[1,128], index: 4, kind: input, shape index: {}]
  %s5 = inlined_call_operand.hbm [shape: bf16[128,384], index: 5, kind: input, shape index: {}]
  %s6 = inlined_call_operand.hbm [shape: f32[1,384], index: 6, kind: input, shape index: {}]
  %s7 = inlined_call_operand.vmem [shape: f32[8,384], index: 7, kind: output, shape index: {}]
  %s8 = sld [smem:[#allocation0]]
  $region50: #{generator_forward.1} parent=0
    _
  %s10 = ssub.s32 1, %s8
  %s11 = scalar_select 0, %s10, %s8
  $region1: #{generator_forward.1} parent=0
    #allocation2 [shape = 'u8[32768]{0}', space=vmem, size = 0x8000, scoped, tag = 'input window, operand 3, single buffered']
    #allocation3 [shape = 's32[1]{0}', space=sflag, size = 0x4, scoped, tag = 'scoped memory for generator_forward.1']
    #allocation4 [shape = 'u8[98304]{0}', space=vmem, size = 0x18000, scoped, tag = 'input window, operand 5, single buffered']
    #allocation5 [shape = 's32[1]{0}', space=sflag, size = 0x4, scoped, tag = 'scoped memory for generator_forward.1']
    #allocation6 [shape = 'u8[1536]{0}', space=vmem, size = 0x800, scoped, tag = 'input window, operand 6, single buffered']
    %12 = vsyncpa [#allocation3], 0
    %13 = vsyncpa [#allocation5], 0
    // Predicated region
    $region2: #{generator_forward.1} parent=1 // pred_check
      _
    $region3: #{generator_forward.1} parent=1 // pred_check_branch
      %15 = sbr.rel (0) target = $region5
    $region4: #{generator_forward.1} parent=1 // pred_region
      _
    $region5: #{generator_forward.1} parent=1 // pred_fallthru
      _
    // Predicated region
    $region6: #{generator_forward.1} parent=1 // pred_check
      _
    $region7: #{generator_forward.1} parent=1 // pred_check_branch
      %17 = sbr.rel (0) target = $region9
    $region8: #{generator_forward.1} parent=1 // pred_region
      _
    $region9: #{generator_forward.1} parent=1 // pred_fallthru
      _
    // Predicated region
    $region10: #{generator_forward.1} parent=1 // pred_check
      _
    $region11: #{generator_forward.1} parent=1 // pred_check_branch
      %19 = sbr.rel (0) target = $region13
    $region12: #{generator_forward.1} parent=1 // pred_region
      _
    $region13: #{generator_forward.1} parent=1 // pred_fallthru
      _
    // Predicated region
    $region14: #{generator_forward.1} parent=1 // pred_check
      _
    $region15: #{generator_forward.1} parent=1 // pred_check_branch
      %21 = sbr.rel (0) target = $region17
    $region16: #{generator_forward.1} parent=1 // pred_region
      %s23 = ssub.s32 1024, 1024
      %24 = vsyncadd [#allocation3], %s23
      %s25 = sshll.u32 [#allocation2], 4
      %s26 = int_to_ptr.vmem [resolvable:$true] %s25
      %31 = dma.hbm_to_vmem [thread:$0]  %s3, 1024, %s26, [#allocation3], 64, 64, 4
    $region17: #{generator_forward.1} parent=1 // pred_fallthru
      _
    // Predicated region
    $region18: #{generator_forward.1} parent=1 // pred_check
      _
    $region19: #{generator_forward.1} parent=1 // pred_check_branch
      %33 = sbr.rel (0) target = $region21
    $region20: #{generator_forward.1} parent=1 // pred_region
      _
    $region21: #{generator_forward.1} parent=1 // pred_fallthru
      _
    // Predicated region
    $region22: #{generator_forward.1} parent=1 // pred_check
      _
    $region23: #{generator_forward.1} parent=1 // pred_check_branch
      %35 = sbr.rel (0) target = $region25
    $region24: #{generator_forward.1} parent=1 // pred_region
      %s37 = ssub.s32 3072, 3072
      %38 = vsyncadd [#allocation5], %s37
      %s39 = sshll.u32 [#allocation4], 4
      %s40 = int_to_ptr.vmem [resolvable:$true] %s39
      %45 = dma.hbm_to_vmem [thread:$0]  %s5, 3072, %s40, [#allocation5], 192, 192, 12
    $region25: #{generator_forward.1} parent=1 // pred_fallthru
      _
    // Predicated region
    $region26: #{generator_forward.1} parent=1 // pred_check
      _
    $region27: #{generator_forward.1} parent=1 // pred_check_branch
      %47 = sbr.rel (0) target = $region29
    $region28: #{generator_forward.1} parent=1 // pred_region
      %s49 = ssub.s32 48, 48
      %50 = vsyncadd [#allocation5], %s49
      %s52 = sshll.u32 [#allocation6], 4
      %s53 = int_to_ptr.vmem [resolvable:$true] %s52
      %55 = dma.hbm_to_vmem [thread:$0]  %s6, 48, %s53, [#allocation5]
    $region29: #{generator_forward.1} parent=1 // pred_fallthru
      _
    // Predicated region
    $region30: #{generator_forward.1} parent=1 // pred_check
      _
    $region31: #{generator_forward.1} parent=1 // pred_check_branch
      %57 = sbr.rel (0) target = $region33
    $region32: #{generator_forward.1} parent=1 // pred_region
      %58 = dma.done [#allocation3], 1024
    $region33: #{generator_forward.1} parent=1 // pred_fallthru
      _
    // Predicated region
    $region34: #{generator_forward.1} parent=1 // pred_check
      _
    $region35: #{generator_forward.1} parent=1 // pred_check_branch
      %60 = sbr.rel (0) target = $region37
    $region36: #{generator_forward.1} parent=1 // pred_region
      %61 = dma.done [#allocation5], 3072
    $region37: #{generator_forward.1} parent=1 // pred_fallthru
      _
    // Predicated region
    $region38: #{generator_forward.1} parent=1 // pred_check
      _
    $region39: #{generator_forward.1} parent=1 // pred_check_branch
      %63 = sbr.rel (0) target = $region41
    $region40: #{generator_forward.1} parent=1 // pred_region
      %64 = dma.done [#allocation5], 48
    $region41: #{generator_forward.1} parent=1 // pred_fallthru
      _
    %v66 = vld [vmem:[%s0] sm:$0xff]
    %v67 = vpack.c.bf16 %v66, %v66
    %v68 = vld [vmem:[%s1] sm:$0xf]
    %v69 = vld [vmem:[%s1 + $0x4] sm:$0xf]
    %v70 = vld [vmem:[%s1 + $0x8] sm:$0xf]
    %v71 = vld [vmem:[%s1 + $0xc] sm:$0xf]
    %v72 = vld [vmem:[%s2] sm:$0x1]
    %v74 = vlaneseq
    %v75 = vshrl.u32 %v74, 7
    %v76 = vsub.s32 0, %v75
    %v77 = vrot.slane %v72, %v76
    %v83 = vunpack.c.l.b16 %v68
    %v84 = vunpack.c.l.b16 %v69
    %v85 = vunpack.c.l.b16 %v70
    %v86 = vunpack.c.l.b16 %v71
    %v87 = vpack.c.b16 %v84, %v83
    %v88 = vpack.c.b16 %v86, %v85
    %vm91 = vcmask 261120
    %v93 = vsel %vm91, %v67, 0
    %95 = vmatprep.subr.bf16.mxu0 0
    %96 = vmatpush1.bf16.msra.mxu0 %v87
    %97 = vmatprep.subr.bf16.mxu0 0
    %98 = vmatpush1.bf16.msra.mxu0 %v88
    %99 = vmatprep.subr.bf16.mxu0 0
    %100 = vmatpush1.bf16.msra.mxu0 0
    %101 = vmatprep.subr.bf16.mxu0 0
    %102 = vmatpush1.bf16.msra.mxu0 0
    %103 = vmatprep.subr.bf16.mxu0 0
    %104 = vmatpush1.bf16.msra.mxu0 0
    %105 = vmatprep.subr.bf16.mxu0 0
    %106 = vmatpush1.bf16.msra.mxu0 0
    %107 = vmatprep.subr.bf16.mxu0 0
    %108 = vmatpush1.bf16.msra.mxu0 0
    %109 = vmatprep.subr.bf16.mxu0 0
    %110 = vmatpush1.bf16.msra.mxu0 0
    %111 = vmatprep.subr.bf16.mxu0 0
    %112 = vmatpush1.bf16.msra.mxu0 0
    %113 = vmatprep.subr.bf16.mxu0 0
    %114 = vmatpush1.bf16.msra.mxu0 0
    %115 = vmatprep.subr.bf16.mxu0 0
    %116 = vmatpush1.bf16.msra.mxu0 0
    %117 = vmatprep.subr.bf16.mxu0 0
    %118 = vmatpush1.bf16.msra.mxu0 0
    %119 = vmatprep.subr.bf16.mxu0 0
    %120 = vmatpush1.bf16.msra.mxu0 0
    %121 = vmatprep.subr.bf16.mxu0 0
    %122 = vmatpush1.bf16.msra.mxu0 0
    %123 = vmatprep.subr.bf16.mxu0 0
    %124 = vmatpush1.bf16.msra.mxu0 0
    %125 = vmatprep.subr.bf16.mxu0 0
    %126 = vmatpush1.bf16.msra.mxu0 0
    %127 = vmatprep.mubr.bf16.mxu0 0
    %128 = vmatmul.mubr.bf16.gmra.mrb[0].mxu0 %v93
    %v129 = vpop.f32.mrb[0].mxu0
    %v130 = vadd.f32 %v77, %v129
    %v131 = vpop.f32.mrb[0].mxu0
    %v132 = vpop.f32.mrb[0].mxu0
    %v133 = vpop.f32.mrb[0].mxu0
    %134 = vdwg.mxu0
    %v135 = vtanh.pop %v130
    %v136 = vpack.c.bf16 %v135, %v135
    %v137 = vld [vmem:[#allocation2] sm:$0xf]
    %v138 = vld [vmem:[#allocation2 + $0x4] sm:$0xf]
    %v139 = vld [vmem:[#allocation2 + $0x8] sm:$0xf]
    %v140 = vld [vmem:[#allocation2 + $0xc] sm:$0xf]
    %v141 = vld [vmem:[#allocation2 + $0x10] sm:$0xf]
    %v142 = vld [vmem:[#allocation2 + $0x14] sm:$0xf]
    %v143 = vld [vmem:[#allocation2 + $0x18] sm:$0xf]
    %v144 = vld [vmem:[#allocation2 + $0x1c] sm:$0xf]
    %v145 = vld [vmem:[#allocation2 + $0x20] sm:$0xf]
    %v146 = vld [vmem:[#allocation2 + $0x24] sm:$0xf]
    %v147 = vld [vmem:[#allocation2 + $0x28] sm:$0xf]
    %v148 = vld [vmem:[#allocation2 + $0x2c] sm:$0xf]
    %v149 = vld [vmem:[#allocation2 + $0x30] sm:$0xf]
    %v150 = vld [vmem:[#allocation2 + $0x34] sm:$0xf]
    %v151 = vld [vmem:[#allocation2 + $0x38] sm:$0xf]
    %v152 = vld [vmem:[#allocation2 + $0x3c] sm:$0xf]
    %v153 = vld [vmem:[%s4] sm:$0x1]
    %v155 = vlaneseq
    %v156 = vshrl.u32 %v155, 7
    %v157 = vsub.s32 0, %v156
    %v158 = vrot.slane %v153, %v157
    %v176 = vunpack.c.l.b16 %v137
    %v177 = vunpack.c.l.b16 %v138
    %v178 = vunpack.c.l.b16 %v139
    %v179 = vunpack.c.l.b16 %v140
    %v180 = vunpack.c.l.b16 %v141
    %v181 = vunpack.c.l.b16 %v142
    %v182 = vunpack.c.l.b16 %v143
    %v183 = vunpack.c.l.b16 %v144
    %v184 = vunpack.c.l.b16 %v145
    %v185 = vunpack.c.l.b16 %v146
    %v186 = vunpack.c.l.b16 %v147
    %v187 = vunpack.c.l.b16 %v148
    %v188 = vunpack.c.l.b16 %v149
    %v189 = vunpack.c.l.b16 %v150
    %v190 = vunpack.c.l.b16 %v151
    %v191 = vunpack.c.l.b16 %v152
    %v192 = vpack.c.b16 %v177, %v176
    %v193 = vpack.c.b16 %v179, %v178
    %v194 = vpack.c.b16 %v181, %v180
    %v195 = vpack.c.b16 %v183, %v182
    %v196 = vpack.c.b16 %v185, %v184
    %v197 = vpack.c.b16 %v187, %v186
    %v198 = vpack.c.b16 %v189, %v188
    %v199 = vpack.c.b16 %v191, %v190
    %208 = vmatprep.subr.bf16.mxu0 0
    %209 = vmatpush1.bf16.msra.mxu0 %v192
    %210 = vmatprep.subr.bf16.mxu0 0
    %211 = vmatpush1.bf16.msra.mxu0 %v193
    %212 = vmatprep.subr.bf16.mxu0 0
    %213 = vmatpush1.bf16.msra.mxu0 %v194
    %214 = vmatprep.subr.bf16.mxu0 0
    %215 = vmatpush1.bf16.msra.mxu0 %v195
    %216 = vmatprep.subr.bf16.mxu0 0
    %217 = vmatpush1.bf16.msra.mxu0 %v196
    %218 = vmatprep.subr.bf16.mxu0 0
    %219 = vmatpush1.bf16.msra.mxu0 %v197
    %220 = vmatprep.subr.bf16.mxu0 0
    %221 = vmatpush1.bf16.msra.mxu0 %v198
    %222 = vmatprep.subr.bf16.mxu0 0
    %223 = vmatpush1.bf16.msra.mxu0 %v199
    %224 = vmatprep.subr.bf16.mxu0 0
    %225 = vmatpush1.bf16.msra.mxu0 0
    %226 = vmatprep.subr.bf16.mxu0 0
    %227 = vmatpush1.bf16.msra.mxu0 0
    %228 = vmatprep.subr.bf16.mxu0 0
    %229 = vmatpush1.bf16.msra.mxu0 0
    %230 = vmatprep.subr.bf16.mxu0 0
    %231 = vmatpush1.bf16.msra.mxu0 0
    %232 = vmatprep.subr.bf16.mxu0 0
    %233 = vmatpush1.bf16.msra.mxu0 0
    %234 = vmatprep.subr.bf16.mxu0 0
    %235 = vmatpush1.bf16.msra.mxu0 0
    %236 = vmatprep.subr.bf16.mxu0 0
    %237 = vmatpush1.bf16.msra.mxu0 0
    %238 = vmatprep.subr.bf16.mxu0 0
    %239 = vmatpush1.bf16.msra.mxu0 0
    %240 = vmatprep.mubr.bf16.mxu0 0
    %241 = vmatmul.mubr.bf16.gmra.mrb[0].mxu0 %v136
    %v242 = vpop.f32.mrb[0].mxu0
    %v243 = vadd.f32 %v158, %v242
    %v244 = vpop.f32.mrb[0].mxu0
    %v245 = vpop.f32.mrb[0].mxu0
    %v246 = vpop.f32.mrb[0].mxu0
    %247 = vdwg.mxu0
    %v248 = vtanh.pop %v243
    %v249 = vpack.c.bf16 %v248, %v248
    %v250 = vld [vmem:[#allocation4] sm:$0xff]
    %v251 = vld [vmem:[#allocation4 + $0x8] sm:$0xf]
    %v252 = vld [vmem:[#allocation4 + $0xc] sm:$0xff]
    %v253 = vld [vmem:[#allocation4 + $0x14] sm:$0xf]
    %v254 = vld [vmem:[#allocation4 + $0x18] sm:$0xff]
    %v255 = vld [vmem:[#allocation4 + $0x20] sm:$0xf]
    %v256 = vld [vmem:[#allocation4 + $0x24] sm:$0xff]
    %v257 = vld [vmem:[#allocation4 + $0x2c] sm:$0xf]
    %v258 = vld [vmem:[#allocation4 + $0x30] sm:$0xff]
    %v259 = vld [vmem:[#allocation4 + $0x38] sm:$0xf]
    %v260 = vld [vmem:[#allocation4 + $0x3c] sm:$0xff]
    %v261 = vld [vmem:[#allocation4 + $0x44] sm:$0xf]
    %v262 = vld [vmem:[#allocation4 + $0x48] sm:$0xff]
    %v263 = vld [vmem:[#allocation4 + $0x50] sm:$0xf]
    %v264 = vld [vmem:[#allocation4 + $0x54] sm:$0xff]
    %v265 = vld [vmem:[#allocation4 + $0x5c] sm:$0xf]
    %v266 = vld [vmem:[#allocation4 + $0x60] sm:$0xff]
    %v267 = vld [vmem:[#allocation4 + $0x68] sm:$0xf]
    %v268 = vld [vmem:[#allocation4 + $0x6c] sm:$0xff]
    %v269 = vld [vmem:[#allocation4 + $0x74] sm:$0xf]
    %v270 = vld [vmem:[#allocation4 + $0x78] sm:$0xff]
    %v271 = vld [vmem:[#allocation4 + $0x80] sm:$0xf]
    %v272 = vld [vmem:[#allocation4 + $0x84] sm:$0xff]
    %v273 = vld [vmem:[#allocation4 + $0x8c] sm:$0xf]
    %v274 = vld [vmem:[#allocation4 + $0x90] sm:$0xff]
    %v275 = vld [vmem:[#allocation4 + $0x98] sm:$0xf]
    %v276 = vld [vmem:[#allocation4 + $0x9c] sm:$0xff]
    %v277 = vld [vmem:[#allocation4 + $0xa4] sm:$0xf]
    %v278 = vld [vmem:[#allocation4 + $0xa8] sm:$0xff]
    %v279 = vld [vmem:[#allocation4 + $0xb0] sm:$0xf]
    %v280 = vld [vmem:[#allocation4 + $0xb4] sm:$0xff]
    %v281 = vld [vmem:[#allocation4 + $0xbc] sm:$0xf]
    %v282 = vld [vmem:[#allocation6] sm:$0x7]
    %v284 = vlaneseq
    %v285 = vshrl.u32 %v284, 7
    %v286 = vsub.s32 0, %v285
    %v287 = vrot.slane %v282, %v286
    %v288 = vlaneseq
    %v289 = vshrl.u32 %v288, 7
    %v290 = vsub.s32 1, %v289
    %v291 = vrot.slane %v282, %v290
    %v292 = vlaneseq
    %v293 = vshrl.u32 %v292, 7
    %v294 = vsub.s32 2, %v293
    %v295 = vrot.slane %v282, %v294
    %v331 = vunpack.c.l.b16 %v250
    %v332 = vunpack.c.h.b16 %v250
    %v333 = vunpack.c.l.b16 %v251
    %v334 = vunpack.c.l.b16 %v252
    %v335 = vunpack.c.h.b16 %v252
    %v336 = vunpack.c.l.b16 %v253
    %v337 = vunpack.c.l.b16 %v254
    %v338 = vunpack.c.h.b16 %v254
    %v339 = vunpack.c.l.b16 %v255
    %v340 = vunpack.c.l.b16 %v256
    %v341 = vunpack.c.h.b16 %v256
    %v342 = vunpack.c.l.b16 %v257
    %v343 = vunpack.c.l.b16 %v258
    %v344 = vunpack.c.h.b16 %v258
    %v345 = vunpack.c.l.b16 %v259
    %v346 = vunpack.c.l.b16 %v260
    %v347 = vunpack.c.h.b16 %v260
    %v348 = vunpack.c.l.b16 %v261
    %v349 = vunpack.c.l.b16 %v262
    %v350 = vunpack.c.h.b16 %v262
    %v351 = vunpack.c.l.b16 %v263
    %v352 = vunpack.c.l.b16 %v264
    %v353 = vunpack.c.h.b16 %v264
    %v354 = vunpack.c.l.b16 %v265
    %v355 = vunpack.c.l.b16 %v266
    %v356 = vunpack.c.h.b16 %v266
    %v357 = vunpack.c.l.b16 %v267
    %v358 = vunpack.c.l.b16 %v268
    %v359 = vunpack.c.h.b16 %v268
    %v360 = vunpack.c.l.b16 %v269
    %v361 = vunpack.c.l.b16 %v270
    %v362 = vunpack.c.h.b16 %v270
    %v363 = vunpack.c.l.b16 %v271
    %v364 = vunpack.c.l.b16 %v272
    %v365 = vunpack.c.h.b16 %v272
    %v366 = vunpack.c.l.b16 %v273
    %v367 = vunpack.c.l.b16 %v274
    %v368 = vunpack.c.h.b16 %v274
    %v369 = vunpack.c.l.b16 %v275
    %v370 = vunpack.c.l.b16 %v276
    %v371 = vunpack.c.h.b16 %v276
    %v372 = vunpack.c.l.b16 %v277
    %v373 = vunpack.c.l.b16 %v278
    %v374 = vunpack.c.h.b16 %v278
    %v375 = vunpack.c.l.b16 %v279
    %v376 = vunpack.c.l.b16 %v280
    %v377 = vunpack.c.h.b16 %v280
    %v378 = vunpack.c.l.b16 %v281
    %v379 = vpack.c.b16 %v334, %v331
    %v380 = vpack.c.b16 %v335, %v332
    %v381 = vpack.c.b16 %v336, %v333
    %v382 = vpack.c.b16 %v340, %v337
    %v383 = vpack.c.b16 %v341, %v338
    %v384 = vpack.c.b16 %v342, %v339
    %v385 = vpack.c.b16 %v346, %v343
    %v386 = vpack.c.b16 %v347, %v344
    %v387 = vpack.c.b16 %v348, %v345
    %v388 = vpack.c.b16 %v352, %v349
    %v389 = vpack.c.b16 %v353, %v350
    %v390 = vpack.c.b16 %v354, %v351
    %v391 = vpack.c.b16 %v358, %v355
    %v392 = vpack.c.b16 %v359, %v356
    %v393 = vpack.c.b16 %v360, %v357
    %v394 = vpack.c.b16 %v364, %v361
    %v395 = vpack.c.b16 %v365, %v362
    %v396 = vpack.c.b16 %v366, %v363
    %v397 = vpack.c.b16 %v370, %v367
    %v398 = vpack.c.b16 %v371, %v368
    %v399 = vpack.c.b16 %v372, %v369
    %v400 = vpack.c.b16 %v376, %v373
    %v401 = vpack.c.b16 %v377, %v374
    %v402 = vpack.c.b16 %v378, %v375
    %427 = vmatprep.subr.bf16.mxu0 %v380
    %428 = vmatpush1.bf16.msra.mxu0 %v379
    %429 = vmatprep.subr.bf16.mxu0 %v383
    %430 = vmatpush1.bf16.msra.mxu0 %v382
    %431 = vmatprep.subr.bf16.mxu0 %v386
    %432 = vmatpush1.bf16.msra.mxu0 %v385
    %433 = vmatprep.subr.bf16.mxu0 %v389
    %434 = vmatpush1.bf16.msra.mxu0 %v388
    %435 = vmatprep.subr.bf16.mxu0 %v392
    %436 = vmatpush1.bf16.msra.mxu0 %v391
    %437 = vmatprep.subr.bf16.mxu0 %v395
    %438 = vmatpush1.bf16.msra.mxu0 %v394
    %439 = vmatprep.subr.bf16.mxu0 %v398
    %440 = vmatpush1.bf16.msra.mxu0 %v397
    %441 = vmatprep.subr.bf16.mxu0 %v401
    %442 = vmatpush1.bf16.msra.mxu0 %v400
    %443 = vmatprep.subr.bf16.mxu0 0
    %444 = vmatpush1.bf16.msra.mxu0 0
    %445 = vmatprep.subr.bf16.mxu0 0
    %446 = vmatpush1.bf16.msra.mxu0 0
    %447 = vmatprep.subr.bf16.mxu0 0
    %448 = vmatpush1.bf16.msra.mxu0 0
    %449 = vmatprep.subr.bf16.mxu0 0
    %450 = vmatpush1.bf16.msra.mxu0 0
    %451 = vmatprep.subr.bf16.mxu0 0
    %452 = vmatpush1.bf16.msra.mxu0 0
    %453 = vmatprep.subr.bf16.mxu0 0
    %454 = vmatpush1.bf16.msra.mxu0 0
    %455 = vmatprep.subr.bf16.mxu0 0
    %456 = vmatpush1.bf16.msra.mxu0 0
    %457 = vmatprep.subr.bf16.mxu0 0
    %458 = vmatpush1.bf16.msra.mxu0 0
    %459 = vmatprep.mubr.bf16.mxu0 0
    %460 = vmatmul.mubr.bf16.gmra.mrb[0].mxu0 %v249
    %v461 = vpop.f32.mrb[0].mxu0
    %v462 = vadd.f32 %v287, %v461
    %v463 = vpop.f32.mrb[0].mxu0
    %v464 = vadd.f32 %v291, %v463
    %v465 = vpop.f32.mrb[0].mxu0
    %v466 = vpop.f32.mrb[0].mxu0
    %467 = vdwg.mxu0
    %468 = vmatprep.subr.bf16.mxu0 0
    %469 = vmatpush1.bf16.msra.mxu0 %v381
    %470 = vmatprep.subr.bf16.mxu0 0
    %471 = vmatpush1.bf16.msra.mxu0 %v384
    %472 = vmatprep.subr.bf16.mxu0 0
    %473 = vmatpush1.bf16.msra.mxu0 %v387
    %474 = vmatprep.subr.bf16.mxu0 0
    %475 = vmatpush1.bf16.msra.mxu0 %v390
    %476 = vmatprep.subr.bf16.mxu0 0
    %477 = vmatpush1.bf16.msra.mxu0 %v393
    %478 = vmatprep.subr.bf16.mxu0 0
    %479 = vmatpush1.bf16.msra.mxu0 %v396
    %480 = vmatprep.subr.bf16.mxu0 0
    %481 = vmatpush1.bf16.msra.mxu0 %v399
    %482 = vmatprep.subr.bf16.mxu0 0
    %483 = vmatpush1.bf16.msra.mxu0 %v402
    %484 = vmatprep.subr.bf16.mxu0 0
    %485 = vmatpush1.bf16.msra.mxu0 0
    %486 = vmatprep.subr.bf16.mxu0 0
    %487 = vmatpush1.bf16.msra.mxu0 0
    %488 = vmatprep.subr.bf16.mxu0 0
    %489 = vmatpush1.bf16.msra.mxu0 0
    %490 = vmatprep.subr.bf16.mxu0 0
    %491 = vmatpush1.bf16.msra.mxu0 0
    %492 = vmatprep.subr.bf16.mxu0 0
    %493 = vmatpush1.bf16.msra.mxu0 0
    %494 = vmatprep.subr.bf16.mxu0 0
    %495 = vmatpush1.bf16.msra.mxu0 0
    %496 = vmatprep.subr.bf16.mxu0 0
    %497 = vmatpush1.bf16.msra.mxu0 0
    %498 = vmatprep.subr.bf16.mxu0 0
    %499 = vmatpush1.bf16.msra.mxu0 0
    %500 = vmatprep.mubr.bf16.mxu0 0
    %501 = vmatmul.mubr.bf16.gmra.mrb[0].mxu0 %v249
    %v502 = vpop.f32.mrb[0].mxu0
    %v503 = vadd.f32 %v295, %v502
    %v504 = vpop.f32.mrb[0].mxu0
    %v505 = vpop.f32.mrb[0].mxu0
    %v506 = vpop.f32.mrb[0].mxu0
    %507 = vdwg.mxu0
    %508 = vst [vmem:[%s7] sm:$0xff] %v462
    %509 = vst [vmem:[%s7 + $0x8] sm:$0xff] %v464
    %510 = vst [vmem:[%s7 + $0x10] sm:$0xff] %v503
    // Predicated region
    $region42: #{generator_forward.1} parent=1 // pred_check
      _
    $region43: #{generator_forward.1} parent=1 // pred_check_branch
      %512 = sbr.rel (0) target = $region45
    $region44: #{generator_forward.1} parent=1 // pred_region
      _
    $region45: #{generator_forward.1} parent=1 // pred_fallthru
      _
    // Predicated region
    $region46: #{generator_forward.1} parent=1 // pred_check
      _
    $region47: #{generator_forward.1} parent=1 // pred_check_branch
      %514 = sbr.rel (0) target = $region49
    $region48: #{generator_forward.1} parent=1 // pred_region
      _
    $region49: #{generator_forward.1} parent=1 // pred_fallthru
      _
    %515 = vsyncpa [#allocation3], 1
    %516 = vsyncpa [#allocation5], 1

</llo_original>
